<compile_context>
chip_gen: v7x
topology: tpu7x:2x2x1
jax: 0.10.0
libtpu: 0.0.40
codegen_flags: <defaults>
</compile_context>

<pallas_src>
import jax
import jax.numpy as jnp
from jax.experimental import pallas as pl
from jax.experimental.pallas import tpu as pltpu


def dual_memory_kernel(x_ref, pmem_ref, smem_ref, p_out_ref, s_out_ref):
    x = x_ref[...]        # (B, D)  f32
    pm = pmem_ref[...]    # (D, M)  f32  primary memory, canonical MXU weight layout
    sm = smem_ref[...]    # (D, M)  f32  secondary memory

    # Row / column squared norms (tiny XLU reduces at this size).
    x_sq = jnp.sum(x * x, axis=1, keepdims=True)       # (B, 1)
    pm_sq = jnp.sum(pm * pm, axis=0, keepdims=True)    # (1, M)
    sm_sq = jnp.sum(sm * sm, axis=0, keepdims=True)    # (1, M)

    # Standard (B, D) . (D, M) contractions -> MXU, no transpose / relayout.
    xp = jnp.dot(x, pm, preferred_element_type=jnp.float32)   # (B, M)
    xs = jnp.dot(x, sm, preferred_element_type=jnp.float32)   # (B, M)

    # ||x - m||^2 = ||x||^2 + ||m||^2 - 2 x.m  (clamped for numerical safety).
    p_d2 = jnp.maximum(x_sq + pm_sq - 2.0 * xp, 0.0)
    s_d2 = jnp.maximum(x_sq + sm_sq - 2.0 * xs, 0.0)

    # Two lane-dense (B, M) stores.
    p_out_ref[...] = jnp.sqrt(p_d2).astype(p_out_ref.dtype)
    s_out_ref[...] = jnp.sqrt(s_d2).astype(s_out_ref.dtype)


def prepare_memories(primary_memory, secondary_memory):
    """One-time (per parameter update) repack: (M, D) -> (D, M), f32.

    Equivalent to storing the nn.Parameter transposed; keeps the per-call
    path free of layout/transpose XLA ops.
    """
    return (primary_memory.T.astype(jnp.float32),
            secondary_memory.T.astype(jnp.float32))


@jax.jit
def dual_memory_forward(feature_vector, primary_memory_t, secondary_memory_t):
    """feature_vector: (B, D); memories pre-transposed to (D, M)."""
    B, D = feature_vector.shape
    D2, M = primary_memory_t.shape
    assert D == D2 and secondary_memory_t.shape == (D, M)

    x = feature_vector.astype(jnp.float32)
    vmem_spec = pl.BlockSpec(memory_space=pltpu.MemorySpace.VMEM)

    # Whole problem (~50 KB) lives in VMEM: no grid, no pipelining machinery.
    p_sim, s_sim = pl.pallas_call(
        dual_memory_kernel,
        out_shape=(jax.ShapeDtypeStruct((B, M), jnp.float32),
                   jax.ShapeDtypeStruct((B, M), jnp.float32)),
        in_specs=[vmem_spec, vmem_spec, vmem_spec],
        out_specs=(vmem_spec, vmem_spec),
    )(x, primary_memory_t, secondary_memory_t)

    return p_sim, s_sim


if __name__ == "__main__":
    # Small, deterministic problem consistent with the module:
    #   input_size (feature dim) = 32, memory_size = 128, batch = 8
    B, D, M = 8, 32, 128

    key = jax.random.PRNGKey(0)
    k_x, k_p, k_s = jax.random.split(key, 3)

    feature_vector = jax.random.normal(k_x, (B, D), dtype=jnp.float32)
    # nn.Parameter(torch.randn(memory_size, input_size) * 0.01)
    primary_memory = jax.random.normal(k_p, (M, D), dtype=jnp.float32) * 0.01
    secondary_memory = jax.random.normal(k_s, (M, D), dtype=jnp.float32) * 0.01

    # One-time repack (analogous to storing the parameters transposed).
    pmem_t, smem_t = prepare_memories(primary_memory, secondary_memory)

    p_sim, s_sim = dual_memory_forward(feature_vector, pmem_t, smem_t)
    jax.block_until_ready((p_sim, s_sim))

    # Pure-JAX reference (torch.norm(mem[None] - x[:, None], dim=2)).
    p_ref = jnp.linalg.norm(primary_memory[None, :, :] - feature_vector[:, None, :], axis=2)
    s_ref = jnp.linalg.norm(secondary_memory[None, :, :] - feature_vector[:, None, :], axis=2)
    assert p_sim.shape == (B, M) and s_sim.shape == (B, M)
    assert jnp.allclose(p_sim, p_ref, atol=1e-4, rtol=1e-4)
    assert jnp.allclose(s_sim, s_ref, atol=1e-4, rtol=1e-4)

    print("KERNEL_OK")
</pallas_src>

<mosaic_0001>
module attributes {stable_mosaic.version = 11 : i64} {
  func.func @dual_memory_kernel(%arg0: memref<8x32xf32, #tpu.memory_space<vmem>>, %arg1: memref<32x128xf32, #tpu.memory_space<vmem>>, %arg2: memref<32x128xf32, #tpu.memory_space<vmem>>, %arg3: memref<8x128xf32, #tpu.memory_space<vmem>>, %arg4: memref<8x128xf32, #tpu.memory_space<vmem>>) attributes {dimension_semantics = [], scalar_prefetch = 0 : i64, scratch_operands = 0 : i64, tpu.core_type = #tpu.core_type<tc>} {
    %c0 = arith.constant 0 : index
    %c0_0 = arith.constant 0 : index
    %0 = vector.load %arg0[%c0, %c0_0] : memref<8x32xf32, #tpu.memory_space<vmem>>, vector<8x32xf32>
    %c0_1 = arith.constant 0 : index
    %c0_2 = arith.constant 0 : index
    %1 = vector.load %arg1[%c0_1, %c0_2] : memref<32x128xf32, #tpu.memory_space<vmem>>, vector<32x128xf32>
    %c0_3 = arith.constant 0 : index
    %c0_4 = arith.constant 0 : index
    %2 = vector.load %arg2[%c0_3, %c0_4] : memref<32x128xf32, #tpu.memory_space<vmem>>, vector<32x128xf32>
    %3 = arith.mulf %0, %0 : vector<8x32xf32>
    %cst = arith.constant dense<0.000000e+00> : vector<8xf32>
    %4 = vector.multi_reduction <add>, %3, %cst [1] : vector<8x32xf32> to vector<8xf32>
    %5 = vector.shape_cast %4 : vector<8xf32> to vector<8x1xf32>
    %6 = arith.mulf %1, %1 : vector<32x128xf32>
    %cst_5 = arith.constant dense<0.000000e+00> : vector<128xf32>
    %7 = vector.multi_reduction <add>, %6, %cst_5 [0] : vector<32x128xf32> to vector<128xf32>
    %8 = vector.shape_cast %7 : vector<128xf32> to vector<1x128xf32>
    %9 = arith.mulf %2, %2 : vector<32x128xf32>
    %cst_6 = arith.constant dense<0.000000e+00> : vector<128xf32>
    %10 = vector.multi_reduction <add>, %9, %cst_6 [0] : vector<32x128xf32> to vector<128xf32>
    %11 = vector.shape_cast %10 : vector<128xf32> to vector<1x128xf32>
    %cst_7 = arith.constant dense<0.000000e+00> : vector<8x128xf32>
    %12 = tpu.matmul %0, %1, %cst_7 {dimension_numbers = #tpu.dot_dimension_numbers<[1], [0], [0], [1], [0, 0, 1, 1], [], []>} : vector<8x32xf32>, vector<32x128xf32>, vector<8x128xf32> -> vector<8x128xf32>
    %cst_8 = arith.constant dense<0.000000e+00> : vector<8x128xf32>
    %13 = tpu.matmul %0, %2, %cst_8 {dimension_numbers = #tpu.dot_dimension_numbers<[1], [0], [0], [1], [0, 0, 1, 1], [], []>} : vector<8x32xf32>, vector<32x128xf32>, vector<8x128xf32> -> vector<8x128xf32>
    %14 = vector.broadcast %5 : vector<8x1xf32> to vector<8x128xf32>
    %15 = vector.broadcast %8 : vector<1x128xf32> to vector<8x128xf32>
    %16 = arith.addf %14, %15 : vector<8x128xf32>
    %cst_9 = arith.constant 2.000000e+00 : f32
    %17 = vector.broadcast %cst_9 : f32 to vector<8x128xf32>
    %18 = arith.mulf %17, %12 : vector<8x128xf32>
    %19 = arith.subf %16, %18 : vector<8x128xf32>
    %cst_10 = arith.constant 0.000000e+00 : f32
    %20 = vector.broadcast %cst_10 : f32 to vector<8x128xf32>
    %21 = arith.maximumf %19, %20 : vector<8x128xf32>
    %22 = vector.broadcast %5 : vector<8x1xf32> to vector<8x128xf32>
    %23 = vector.broadcast %11 : vector<1x128xf32> to vector<8x128xf32>
    %24 = arith.addf %22, %23 : vector<8x128xf32>
    %cst_11 = arith.constant 2.000000e+00 : f32
    %25 = vector.broadcast %cst_11 : f32 to vector<8x128xf32>
    %26 = arith.mulf %25, %13 : vector<8x128xf32>
    %27 = arith.subf %24, %26 : vector<8x128xf32>
    %cst_12 = arith.constant 0.000000e+00 : f32
    %28 = vector.broadcast %cst_12 : f32 to vector<8x128xf32>
    %29 = arith.maximumf %27, %28 : vector<8x128xf32>
    %30 = math.sqrt %21 : vector<8x128xf32>
    %c0_13 = arith.constant 0 : index
    %c0_14 = arith.constant 0 : index
    %31 = vector.load %arg3[%c0_13, %c0_14] : memref<8x128xf32, #tpu.memory_space<vmem>>, vector<8x128xf32>
    tpu.vector_store %arg3[%c0_13, %c0_14], %30 {strides = array<i32>} : memref<8x128xf32, #tpu.memory_space<vmem>>, vector<8x128xf32>,
    %32 = math.sqrt %29 : vector<8x128xf32>
    %c0_15 = arith.constant 0 : index
    %c0_16 = arith.constant 0 : index
    %33 = vector.load %arg4[%c0_15, %c0_16] : memref<8x128xf32, #tpu.memory_space<vmem>>, vector<8x128xf32>
    tpu.vector_store %arg4[%c0_15, %c0_16], %32 {strides = array<i32>} : memref<8x128xf32, #tpu.memory_space<vmem>>, vector<8x128xf32>,
    return
  }
}

</mosaic_0001>

<llo_original>
// kernel: dual_memory_forward.1
$region0: #{dual_memory_forward.1}
  #allocation0 [shape = 'u32[]', space=smem, size = 0x4, offset = 0x4, fixed_abs, tag = 'smem constant byte address 0x4 - core index']
  #allocation1 [shape = 'u32[144,128]{1,0:T(1,128)}', space=vmem, size = 0x12000, scoped, tag = 'internal scratch']
  %s0 = inlined_call_operand.hbm [shape: f32[8,32], index: 0, kind: input, shape index: {}]
  %s1 = inlined_call_operand.hbm [shape: f32[32,128], index: 1, kind: input, shape index: {}]
  %s2 = inlined_call_operand.hbm [shape: f32[32,128], index: 2, kind: input, shape index: {}]
  %s3 = inlined_call_operand.hbm [shape: f32[8,128], index: 3, kind: output, shape index: {0}]
  %s4 = inlined_call_operand.hbm [shape: f32[8,128], index: 4, kind: output, shape index: {1}]
  %5 = xla_tuple %s3, %s4
  %s6 = sld [smem:[#allocation0]]
  $region42: #{dual_memory_forward.1} parent=0
    _
  %s8 = ssub.s32 1, %s6
  %s9 = scalar_select 0, %s8, %s6
  $region1: #{dual_memory_forward.1} parent=0
    #allocation2 [shape = 'u8[4096]{0}', space=vmem, size = 0x1000, scoped, tag = 'input window, operand 0, single buffered']
    #allocation3 [shape = 's32[1]{0}', space=sflag, size = 0x4, scoped, tag = 'scoped memory for dual_memory_forward.1']
    #allocation4 [shape = 's32[1]{0}', space=sflag, size = 0x4, scoped, tag = 'scoped memory for dual_memory_forward.1']
    #allocation5 [shape = 'u8[16384]{0}', space=vmem, size = 0x4000, scoped, tag = 'input window, operand 1, single buffered']
    #allocation6 [shape = 's32[1]{0}', space=sflag, size = 0x4, scoped, tag = 'scoped memory for dual_memory_forward.1']
    #allocation7 [shape = 'u8[16384]{0}', space=vmem, size = 0x4000, scoped, tag = 'input window, operand 2, single buffered']
    #allocation8 [shape = 'u8[4096]{0}', space=vmem, size = 0x1000, scoped, tag = 'output window, operand 0, single buffered']
    #allocation9 [shape = 'u8[4096]{0}', space=vmem, size = 0x1000, scoped, tag = 'output window, operand 1, single buffered']
    #allocation10 [shape = 's32[1]{0}', space=sflag, size = 0x4, scoped, tag = 'scoped memory for dual_memory_forward.1']
    %10 = vsyncpa [#allocation3], 0
    %11 = vsyncpa [#allocation6], 0
    %12 = vsyncpa [#allocation4], 0
    %13 = vsyncpa [#allocation10], 0
    // Predicated region
    $region2: #{dual_memory_forward.1} parent=1 // pred_check
      _
    $region3: #{dual_memory_forward.1} parent=1 // pred_check_branch
      %15 = sbr.rel (0) target = $region5
    $region4: #{dual_memory_forward.1} parent=1 // pred_region
      %s17 = ssub.s32 128, 128
      %18 = vsyncadd [#allocation3], %s17
      %s20 = sshll.u32 [#allocation2], 4
      %s21 = int_to_ptr.vmem [resolvable:$true] %s20
      %23 = dma.hbm_to_vmem [thread:$0]  %s0, 128, %s21, [#allocation3]
    $region5: #{dual_memory_forward.1} parent=1 // pred_fallthru
      _
    // Predicated region
    $region6: #{dual_memory_forward.1} parent=1 // pred_check
      _
    $region7: #{dual_memory_forward.1} parent=1 // pred_check_branch
      %25 = sbr.rel (0) target = $region9
    $region8: #{dual_memory_forward.1} parent=1 // pred_region
      %s27 = ssub.s32 512, 512
      %28 = vsyncadd [#allocation6], %s27
      %s29 = sshll.u32 [#allocation5], 4
      %s30 = int_to_ptr.vmem [resolvable:$true] %s29
      %35 = dma.hbm_to_vmem [thread:$0]  %s1, 512, %s30, [#allocation6], 128, 128, 8
    $region9: #{dual_memory_forward.1} parent=1 // pred_fallthru
      _
    // Predicated region
    $region10: #{dual_memory_forward.1} parent=1 // pred_check
      _
    $region11: #{dual_memory_forward.1} parent=1 // pred_check_branch
      %37 = sbr.rel (0) target = $region13
    $region12: #{dual_memory_forward.1} parent=1 // pred_region
      %s39 = ssub.s32 512, 512
      %40 = vsyncadd [#allocation6], %s39
      %s41 = sshll.u32 [#allocation7], 4
      %s42 = int_to_ptr.vmem [resolvable:$true] %s41
      %47 = dma.hbm_to_vmem [thread:$0]  %s2, 512, %s42, [#allocation6], 128, 128, 8
    $region13: #{dual_memory_forward.1} parent=1 // pred_fallthru
      _
    // Predicated region
    $region14: #{dual_memory_forward.1} parent=1 // pred_check
      _
    $region15: #{dual_memory_forward.1} parent=1 // pred_check_branch
      %49 = sbr.rel (0) target = $region17
    $region16: #{dual_memory_forward.1} parent=1 // pred_region
      %50 = dma.done [#allocation3], 128
    $region17: #{dual_memory_forward.1} parent=1 // pred_fallthru
      _
    // Predicated region
    $region18: #{dual_memory_forward.1} parent=1 // pred_check
      _
    $region19: #{dual_memory_forward.1} parent=1 // pred_check_branch
      %52 = sbr.rel (0) target = $region21
    $region20: #{dual_memory_forward.1} parent=1 // pred_region
      %53 = dma.done [#allocation6], 512
    $region21: #{dual_memory_forward.1} parent=1 // pred_fallthru
      _
    // Predicated region
    $region22: #{dual_memory_forward.1} parent=1 // pred_check
      _
    $region23: #{dual_memory_forward.1} parent=1 // pred_check_branch
      %55 = sbr.rel (0) target = $region25
    $region24: #{dual_memory_forward.1} parent=1 // pred_region
      %56 = dma.done [#allocation6], 512
    $region25: #{dual_memory_forward.1} parent=1 // pred_fallthru
      _
    %v57 = vld [vmem:[#allocation2] sm:$0xff]
    %v58 = vld [vmem:[#allocation5] sm:$0xff]
    %v59 = vld [vmem:[#allocation5 + $0x8] sm:$0xff]
    %v60 = vld [vmem:[#allocation5 + $0x10] sm:$0xff]
    %v61 = vld [vmem:[#allocation5 + $0x18] sm:$0xff]
    %v62 = vld [vmem:[#allocation7] sm:$0xff]
    %v63 = vld [vmem:[#allocation7 + $0x8] sm:$0xff]
    %v64 = vld [vmem:[#allocation7 + $0x10] sm:$0xff]
    %v65 = vld [vmem:[#allocation7 + $0x18] sm:$0xff]
    %v66 = vmul.f32 %v57, %v57
    %vm67 = vcmask 261120
    %v68 = vsel %vm67, %v66, 0.0
    %69 = vadd.xlane.f32.xlu0 %v68
    %v70 = vpop.xlane.xlu0 %69
    %v71 = vmul.f32 %v58, %v58
    %v72 = vmul.f32 %v59, %v59
    %v73 = vmul.f32 %v60, %v60
    %v74 = vmul.f32 %v61, %v61
    %v75 = vadd.f32 %v71, %v72
    %v76 = vadd.f32 %v75, %v73
    %v77 = vadd.f32 %v76, %v74
    %v78 = vrot.slane %v77, 4
    %v79 = vadd.f32 %v77, %v78
    %v80 = vrot.slane %v79, 2
    %v81 = vadd.f32 %v79, %v80
    %v82 = vrot.slane %v81, 1
    %v83 = vadd.f32 %v81, %v82
    %v84 = vmul.f32 %v62, %v62
    %v85 = vmul.f32 %v63, %v63
    %v86 = vmul.f32 %v64, %v64
    %v87 = vmul.f32 %v65, %v65
    %v88 = vadd.f32 %v84, %v85
    %v89 = vadd.f32 %v88, %v86
    %v90 = vadd.f32 %v89, %v87
    %v91 = vrot.slane %v90, 4
    %v92 = vadd.f32 %v90, %v91
    %v93 = vrot.slane %v92, 2
    %v94 = vadd.f32 %v92, %v93
    %v95 = vrot.slane %v94, 1
    %v96 = vadd.f32 %v94, %v95
    %v98 = vsel %vm67, %v57, 0
    %100 = vmatprep.subr.mxu0 0.0
    %101 = vmatpush1.msra.mxu0 %v58
    %102 = vmatprep.subr.mxu0 0.0
    %103 = vmatpush1.msra.mxu0 %v59
    %104 = vmatprep.subr.mxu0 0.0
    %105 = vmatpush1.msra.mxu0 %v60
    %106 = vmatprep.subr.mxu0 0.0
    %107 = vmatpush1.msra.mxu0 %v61
    %108 = vmatprep.subr.mxu0 0.0
    %109 = vmatpush1.msra.mxu0 0.0
    %110 = vmatprep.subr.mxu0 0.0
    %111 = vmatpush1.msra.mxu0 0.0
    %112 = vmatprep.subr.mxu0 0.0
    %113 = vmatpush1.msra.mxu0 0.0
    %114 = vmatprep.subr.mxu0 0.0
    %115 = vmatpush1.msra.mxu0 0.0
    %116 = vmatprep.subr.mxu0 0.0
    %117 = vmatpush1.msra.mxu0 0.0
    %118 = vmatprep.subr.mxu0 0.0
    %119 = vmatpush1.msra.mxu0 0.0
    %120 = vmatprep.subr.mxu0 0.0
    %121 = vmatpush1.msra.mxu0 0.0
    %122 = vmatprep.subr.mxu0 0.0
    %123 = vmatpush1.msra.mxu0 0.0
    %124 = vmatprep.subr.mxu0 0.0
    %125 = vmatpush1.msra.mxu0 0.0
    %126 = vmatprep.subr.mxu0 0.0
    %127 = vmatpush1.msra.mxu0 0.0
    %128 = vmatprep.subr.mxu0 0.0
    %129 = vmatpush1.msra.mxu0 0.0
    %130 = vmatprep.subr.mxu0 0.0
    %131 = vmatpush1.msra.mxu0 0.0
    %132 = vmatprep.subr.mxu0 0.0
    %133 = vmatpush1.msra.mxu0 0.0
    %134 = vmatprep.subr.mxu0 0.0
    %135 = vmatpush1.msra.mxu0 0.0
    %136 = vmatprep.subr.mxu0 0.0
    %137 = vmatpush1.msra.mxu0 0.0
    %138 = vmatprep.subr.mxu0 0.0
    %139 = vmatpush1.msra.mxu0 0.0
    %140 = vmatprep.subr.mxu0 0.0
    %141 = vmatpush1.msra.mxu0 0.0
    %142 = vmatprep.subr.mxu0 0.0
    %143 = vmatpush1.msra.mxu0 0.0
    %144 = vmatprep.subr.mxu0 0.0
    %145 = vmatpush1.msra.mxu0 0.0
    %146 = vmatprep.subr.mxu0 0.0
    %147 = vmatpush1.msra.mxu0 0.0
    %148 = vmatprep.subr.mxu0 0.0
    %149 = vmatpush1.msra.mxu0 0.0
    %150 = vmatprep.subr.mxu0 0.0
    %151 = vmatpush1.msra.mxu0 0.0
    %152 = vmatprep.subr.mxu0 0.0
    %153 = vmatpush1.msra.mxu0 0.0
    %154 = vmatprep.subr.mxu0 0.0
    %155 = vmatpush1.msra.mxu0 0.0
    %156 = vmatprep.subr.mxu0 0.0
    %157 = vmatpush1.msra.mxu0 0.0
    %158 = vmatprep.subr.mxu0 0.0
    %159 = vmatpush1.msra.mxu0 0.0
    %160 = vmatprep.subr.mxu0 0.0
    %161 = vmatpush1.msra.mxu0 0.0
    %162 = vmatprep.subr.mxu0 0.0
    %163 = vmatpush1.msra.mxu0 0.0
    %164 = vmatprep.mubr.f32.mxu0 0.0
    %165 = vmatmul.mubr.f32.gmra.mrb[0].mxu0 %v98
    %v166 = vpop.f32.mrb[0].mxu0
    %v167 = vadd.f32 0.0, %v166
    %v168 = vpop.f32.mrb[0].mxu0
    %169 = vdwg.mxu0
    %170 = vmatprep.subr.mxu0 0.0
    %171 = vmatpush1.msra.mxu0 %v62
    %172 = vmatprep.subr.mxu0 0.0
    %173 = vmatpush1.msra.mxu0 %v63
    %174 = vmatprep.subr.mxu0 0.0
    %175 = vmatpush1.msra.mxu0 %v64
    %176 = vmatprep.subr.mxu0 0.0
    %177 = vmatpush1.msra.mxu0 %v65
    %178 = vmatprep.subr.mxu0 0.0
    %179 = vmatpush1.msra.mxu0 0.0
    %180 = vmatprep.subr.mxu0 0.0
    %181 = vmatpush1.msra.mxu0 0.0
    %182 = vmatprep.subr.mxu0 0.0
    %183 = vmatpush1.msra.mxu0 0.0
    %184 = vmatprep.subr.mxu0 0.0
    %185 = vmatpush1.msra.mxu0 0.0
    %186 = vmatprep.subr.mxu0 0.0
    %187 = vmatpush1.msra.mxu0 0.0
    %188 = vmatprep.subr.mxu0 0.0
    %189 = vmatpush1.msra.mxu0 0.0
    %190 = vmatprep.subr.mxu0 0.0
    %191 = vmatpush1.msra.mxu0 0.0
    %192 = vmatprep.subr.mxu0 0.0
    %193 = vmatpush1.msra.mxu0 0.0
    %194 = vmatprep.subr.mxu0 0.0
    %195 = vmatpush1.msra.mxu0 0.0
    %196 = vmatprep.subr.mxu0 0.0
    %197 = vmatpush1.msra.mxu0 0.0
    %198 = vmatprep.subr.mxu0 0.0
    %199 = vmatpush1.msra.mxu0 0.0
    %200 = vmatprep.subr.mxu0 0.0
    %201 = vmatpush1.msra.mxu0 0.0
    %202 = vmatprep.subr.mxu0 0.0
    %203 = vmatpush1.msra.mxu0 0.0
    %204 = vmatprep.subr.mxu0 0.0
    %205 = vmatpush1.msra.mxu0 0.0
    %206 = vmatprep.subr.mxu0 0.0
    %207 = vmatpush1.msra.mxu0 0.0
    %208 = vmatprep.subr.mxu0 0.0
    %209 = vmatpush1.msra.mxu0 0.0
    %210 = vmatprep.subr.mxu0 0.0
    %211 = vmatpush1.msra.mxu0 0.0
    %212 = vmatprep.subr.mxu0 0.0
    %213 = vmatpush1.msra.mxu0 0.0
    %214 = vmatprep.subr.mxu0 0.0
    %215 = vmatpush1.msra.mxu0 0.0
    %216 = vmatprep.subr.mxu0 0.0
    %217 = vmatpush1.msra.mxu0 0.0
    %218 = vmatprep.subr.mxu0 0.0
    %219 = vmatpush1.msra.mxu0 0.0
    %220 = vmatprep.subr.mxu0 0.0
    %221 = vmatpush1.msra.mxu0 0.0
    %222 = vmatprep.subr.mxu0 0.0
    %223 = vmatpush1.msra.mxu0 0.0
    %224 = vmatprep.subr.mxu0 0.0
    %225 = vmatpush1.msra.mxu0 0.0
    %226 = vmatprep.subr.mxu0 0.0
    %227 = vmatpush1.msra.mxu0 0.0
    %228 = vmatprep.subr.mxu0 0.0
    %229 = vmatpush1.msra.mxu0 0.0
    %230 = vmatprep.subr.mxu0 0.0
    %231 = vmatpush1.msra.mxu0 0.0
    %232 = vmatprep.subr.mxu0 0.0
    %233 = vmatpush1.msra.mxu0 0.0
    %234 = vmatprep.mubr.f32.mxu0 0.0
    %235 = vmatmul.mubr.f32.gmra.mrb[0].mxu0 %v98
    %v236 = vpop.f32.mrb[0].mxu0
    %v237 = vadd.f32 0.0, %v236
    %v238 = vpop.f32.mrb[0].mxu0
    %239 = vdwg.mxu0
    %v240 = vadd.f32 %v70, %v83
    %v241 = vmul.f32 %v167, 2.0
    %v242 = vsub.f32 %v240, %v241
    %v243 = vmax.f32 %v242, 0.0
    %v244 = vadd.f32 %v70, %v96
    %v245 = vmul.f32 %v237, 2.0
    %v246 = vsub.f32 %v244, %v245
    %v247 = vmax.f32 %v246, 0.0
    %v248 = vrsqrt.pop %v243
    %v249 = vmul.f32 %v243, %v248
    %vm250 = vcmp.eq.f32.partialorder %v243, inf
    %v251 = vsel %vm250, %v243, %v249
    %vm252 = vcmp.eq.f32.partialorder %v243, 0.0
    %v253 = vand.u32 %v243, 2147483648
    %v254 = vsel %vm252, %v253, %v251
    %255 = vst [vmem:[#allocation8] sm:$0xff] %v254
    %v256 = vrsqrt.pop %v247
    %v257 = vmul.f32 %v247, %v256
    %vm258 = vcmp.eq.f32.partialorder %v247, inf
    %v259 = vsel %vm258, %v247, %v257
    %vm260 = vcmp.eq.f32.partialorder %v247, 0.0
    %v261 = vand.u32 %v247, 2147483648
    %v262 = vsel %vm260, %v261, %v259
    %263 = vst [vmem:[#allocation9] sm:$0xff] %v262
    // Predicated region
    $region26: #{dual_memory_forward.1} parent=1 // pred_check
      _
    $region27: #{dual_memory_forward.1} parent=1 // pred_check_branch
      %265 = sbr.rel (0) target = $region29
    $region28: #{dual_memory_forward.1} parent=1 // pred_region
      %s267 = ssub.s32 128, 128
      %268 = vsyncadd [#allocation4], %s267
      %s270 = sshll.u32 [#allocation8], 4
      %s271 = int_to_ptr.vmem [resolvable:$true] %s270
      %273 = dma.vmem_to_hbm [thread:$0]  %s271, 128, %s3, [#allocation4]
    $region29: #{dual_memory_forward.1} parent=1 // pred_fallthru
      _
    // Predicated region
    $region30: #{dual_memory_forward.1} parent=1 // pred_check
      _
    $region31: #{dual_memory_forward.1} parent=1 // pred_check_branch
      %275 = sbr.rel (0) target = $region33
    $region32: #{dual_memory_forward.1} parent=1 // pred_region
      %s277 = ssub.s32 128, 128
      %278 = vsyncadd [#allocation10], %s277
      %s280 = sshll.u32 [#allocation9], 4
      %s281 = int_to_ptr.vmem [resolvable:$true] %s280
      %283 = dma.vmem_to_hbm [thread:$0]  %s281, 128, %s4, [#allocation10]
    $region33: #{dual_memory_forward.1} parent=1 // pred_fallthru
      _
    // Predicated region
    $region34: #{dual_memory_forward.1} parent=1 // pred_check
      _
    $region35: #{dual_memory_forward.1} parent=1 // pred_check_branch
      %285 = sbr.rel (0) target = $region37
    $region36: #{dual_memory_forward.1} parent=1 // pred_region
      %286 = dma.done [#allocation4], 128
    $region37: #{dual_memory_forward.1} parent=1 // pred_fallthru
      _
    // Predicated region
    $region38: #{dual_memory_forward.1} parent=1 // pred_check
      _
    $region39: #{dual_memory_forward.1} parent=1 // pred_check_branch
      %288 = sbr.rel (0) target = $region41
    $region40: #{dual_memory_forward.1} parent=1 // pred_region
      %289 = dma.done [#allocation10], 128
    $region41: #{dual_memory_forward.1} parent=1 // pred_fallthru
      _
    %290 = vsyncpa [#allocation3], 1
    %291 = vsyncpa [#allocation6], 1
    %292 = vsyncpa [#allocation4], 1
    %293 = vsyncpa [#allocation10], 1

</llo_original>
